<compile_context>
chip_gen: v7x
topology: tpu7x:2x2x1
jax: 0.10.0
libtpu: 0.0.40
codegen_flags: <defaults>
</compile_context>

<pallas_src>
import jax
import jax.numpy as jnp
from jax.experimental import pallas as pl
from jax.experimental.pallas import tpu as pltpu


# ---------------------------------------------------------------------------
# Kernels
# ---------------------------------------------------------------------------
def _fused_kernel(x_ref, w_ref, o_ref):
    # x_ref : (tb, 4)     VMEM -- row tile of the input
    # w_ref : (2, 4, h)   VMEM -- both weight chunks (resident across grid)
    # o_ref : (2, tb, h)  VMEM -- both output chunks for this row tile
    x = x_ref[...]
    o_ref[0] = jnp.dot(x, w_ref[0], preferred_element_type=jnp.float32).astype(o_ref.dtype)
    o_ref[1] = jnp.dot(x, w_ref[1], preferred_element_type=jnp.float32).astype(o_ref.dtype)


def _chunked_kernel(x_ref, w_ref, o_ref):
    # Small-B path: one chunk per grid step (2-way parallel for v7x megacore).
    # x_ref : (tb, 4); w_ref : (1, 4, h); o_ref : (1, tb, h)
    o_ref[0] = jnp.dot(
        x_ref[...], w_ref[0], preferred_element_type=jnp.float32
    ).astype(o_ref.dtype)


# ---------------------------------------------------------------------------
# Init-time weight prep (hoisted out of the forward path)
# ---------------------------------------------------------------------------
def prepare_weight(weight):
    """weight: (2h, 4) PyTorch Linear layout (out_features, in_features).
    Returns (2, 4, h): chunk c holds W.T[:, c*h:(c+1)*h], matmul-ready."""
    out_f, in_f = weight.shape
    assert in_f == 4 and out_f % 2 == 0
    h = out_f // 2
    wt = weight.T                                          # (4, 2h)
    return jnp.transpose(wt.reshape(4, 2, h), (1, 0, 2))   # (2, 4, h)


# ---------------------------------------------------------------------------
# VMEM-aware row-tile selection
# ---------------------------------------------------------------------------
def _pick_row_tile(B, h, out_elem_bytes):
    h_pad = max(h, 128)                               # lane padding of output block
    # Per-row bytes of one pipeline buffer: output (both chunks) + x row
    # (the (tb, 4) x tile pads to 128 lanes in VMEM).
    row_bytes = 2 * h_pad * out_elem_bytes + 128 * 4
    budget = 24 * 1024 * 1024                          # headroom under v7x 64 MiB VMEM
    tb = budget // (2 * row_bytes)                     # 2x: double-buffered pipeline
    tb = min(tb, 1024)                                 # 512-1024 rows ~ HBM roofline
    if tb >= 128:
        tb = (tb // 128) * 128
    else:
        tb = max((tb // 8) * 8, 8)
    if tb >= B:
        return B                                       # whole batch in one tile
    return tb


# ---------------------------------------------------------------------------
# Forward
# ---------------------------------------------------------------------------
def submodule_forward(x, w_chunked, *, out_dtype=None, row_tile=None):
    """x: (B, 4); w_chunked: (2, 4, h) from prepare_weight. Returns (2B, h)."""
    B, in_f = x.shape
    assert in_f == 4
    two, _, h = w_chunked.shape
    assert two == 2
    out_dtype = jnp.dtype(out_dtype) if out_dtype is not None else x.dtype

    tb = row_tile if row_tile is not None else _pick_row_tile(B, h, jnp.dtype(out_dtype).itemsize)
    tb = min(tb, B)
    nb = pl.cdiv(B, tb)

    vmem_limit = 32 * 1024 * 1024  # explicit: v5e default scoped limit is 16 MiB

    if nb >= 2:
        # Multi-tile path: collapsed chunk axis, x read once, weight resident.
        out = pl.pallas_call(
            _fused_kernel,
            out_shape=jax.ShapeDtypeStruct((2, B, h), out_dtype),
            grid_spec=pltpu.PrefetchScalarGridSpec(
                num_scalar_prefetch=0,
                grid=(nb,),
                in_specs=[
                    pl.BlockSpec((tb, 4), lambda b: (b, 0)),        # x row tile
                    pl.BlockSpec((2, 4, h), lambda b: (0, 0, 0)),   # full weight, resident
                ],
                out_specs=pl.BlockSpec((2, tb, h), lambda b: (0, b, 0)),
            ),
            compiler_params=pltpu.CompilerParams(
                dimension_semantics=("parallel",),
                vmem_limit_bytes=vmem_limit,
            ),
        )(x, w_chunked)
    else:
        # Single row tile: keep chunk axis as a 2-way parallel grid so v7x's
        # two TensorCores each take one chunk (no-op on v5e/v6e).
        out = pl.pallas_call(
            _chunked_kernel,
            out_shape=jax.ShapeDtypeStruct((2, B, h), out_dtype),
            grid_spec=pltpu.PrefetchScalarGridSpec(
                num_scalar_prefetch=0,
                grid=(2,),
                in_specs=[
                    pl.BlockSpec((tb, 4), lambda c: (0, 0)),        # whole (small) x
                    pl.BlockSpec((1, 4, h), lambda c: (c, 0, 0)),   # weight chunk c
                ],
                out_specs=pl.BlockSpec((1, tb, h), lambda c: (c, 0, 0)),
            ),
            compiler_params=pltpu.CompilerParams(
                dimension_semantics=("parallel",),
                vmem_limit_bytes=vmem_limit,
            ),
        )(x, w_chunked)

    # (2, B, h) -> (2B, h): contiguous view == torch.cat(torch.chunk(y, 2, -1), 0)
    return out.reshape(2 * B, h)


# ---------------------------------------------------------------------------
# Self-test
# ---------------------------------------------------------------------------
if __name__ == "__main__":
    key = jax.random.PRNGKey(0)
    kx1, kw, kx2 = jax.random.split(key, 3)

    def reference(x, weight):
        hh = weight.shape[0] // 2
        y = x @ weight.T                                       # (B, 2h)
        return jnp.concatenate([y[:, :hh], y[:, hh:]], axis=0)  # (2B, h)

    # Small hidden/batch consistent with the module: Linear(4, 2h) with h = 128.
    h = 128
    weight = jax.random.uniform(kw, (2 * h, 4), dtype=jnp.float32,
                                minval=-0.5, maxval=0.5)
    w_chunked = prepare_weight(weight)   # init-time, not per-call

    # Case 1: tiny batch -> single row tile -> 2-way chunk-parallel path.
    B1 = 16
    x1 = jax.random.normal(kx1, (B1, 4), dtype=jnp.float32)
    out1 = jax.block_until_ready(submodule_forward(x1, w_chunked))
    ref1 = reference(x1, weight)
    assert out1.shape == (2 * B1, h), out1.shape
    assert jnp.allclose(out1, ref1, atol=1e-5, rtol=1e-5), "case 1 mismatch"

    # Case 2: multiple row tiles (forced small tile) incl. ragged last tile ->
    # collapsed-chunk fused path with pl.cdiv grid.
    B2 = 20
    x2 = jax.random.normal(kx2, (B2, 4), dtype=jnp.float32)
    out2 = jax.block_until_ready(submodule_forward(x2, w_chunked, row_tile=8))
    ref2 = reference(x2, weight)
    assert out2.shape == (2 * B2, h), out2.shape
    assert jnp.allclose(out2, ref2, atol=1e-5, rtol=1e-5), "case 2 mismatch"

    print("KERNEL_OK")
</pallas_src>

<mosaic_0001>
module attributes {stable_mosaic.version = 11 : i64} {
  func.func @_chunked_kernel(%arg0: i32, %arg1: memref<16x4xf32, #tpu.memory_space<vmem>>, %arg2: memref<1x4x128xf32, #tpu.memory_space<vmem>>, %arg3: memref<1x16x128xf32, #tpu.memory_space<vmem>>) attributes {dimension_semantics = [#tpu.dimension_semantics<parallel>], iteration_bounds = array<i64: 2>, scalar_prefetch = 0 : i64, scratch_operands = 0 : i64, tpu.core_type = #tpu.core_type<tc>, window_params = [{pipeline_mode = #tpu.pipeline_mode<synchronous>, transform_indices = @transform_0, window_bounds = array<i64: 16, 4>}, {transform_indices = @transform_1, window_bounds = array<i64: 1, 4, 128>}, {transform_indices = @transform_2, window_bounds = array<i64: 1, 16, 128>}]} {
    %c0 = arith.constant 0 : index
    %c0_0 = arith.constant 0 : index
    %0 = vector.load %arg1[%c0, %c0_0] : memref<16x4xf32, #tpu.memory_space<vmem>>, vector<16x4xf32>
    %c0_1 = arith.constant 0 : index
    %c0_2 = arith.constant 0 : index
    %c0_3 = arith.constant 0 : index
    %1 = vector.load %arg2[%c0_1, %c0_2, %c0_3] : memref<1x4x128xf32, #tpu.memory_space<vmem>>, vector<1x4x128xf32>
    %2 = vector.shape_cast %1 : vector<1x4x128xf32> to vector<4x128xf32>
    %cst = arith.constant dense<0.000000e+00> : vector<16x128xf32>
    %3 = tpu.matmul %0, %2, %cst {dimension_numbers = #tpu.dot_dimension_numbers<[1], [0], [0], [1], [0, 0, 1, 1], [], []>} : vector<16x4xf32>, vector<4x128xf32>, vector<16x128xf32> -> vector<16x128xf32>
    %c0_4 = arith.constant 0 : index
    %c0_5 = arith.constant 0 : index
    %c0_6 = arith.constant 0 : index
    %4 = vector.load %arg3[%c0_4, %c0_5, %c0_6] : memref<1x16x128xf32, #tpu.memory_space<vmem>>, vector<1x16x128xf32>
    %5 = vector.shape_cast %4 : vector<1x16x128xf32> to vector<16x128xf32>
    %6 = vector.shape_cast %3 : vector<16x128xf32> to vector<1x16x128xf32>
    tpu.vector_store %arg3[%c0_4, %c0_5, %c0_6], %6 {strides = array<i32>} : memref<1x16x128xf32, #tpu.memory_space<vmem>>, vector<1x16x128xf32>,
    return
  }
  func.func @transform_0(%arg0: i32) -> (i32, i32) {
    %c0_i32 = arith.constant 0 : i32
    %c0_i32_0 = arith.constant 0 : i32
    %c0_i32_1 = arith.constant 0 : i32
    return %c0_i32, %c0_i32_0 : i32, i32
  }
  func.func @transform_1(%arg0: i32) -> (i32, i32, i32) {
    %c0_i32 = arith.constant 0 : i32
    %c0_i32_0 = arith.constant 0 : i32
    %c0_i32_1 = arith.constant 0 : i32
    return %arg0, %c0_i32, %c0_i32_0 : i32, i32, i32
  }
  func.func @transform_2(%arg0: i32) -> (i32, i32, i32) {
    %c0_i32 = arith.constant 0 : i32
    %c0_i32_0 = arith.constant 0 : i32
    %c0_i32_1 = arith.constant 0 : i32
    return %arg0, %c0_i32, %c0_i32_0 : i32, i32, i32
  }
}

</mosaic_0001>

<llo_original>
// kernel: tpu_custom_call.1
$region0: #{tpu_custom_call.1}
  #allocation0 [shape = 'u32[]', space=smem, size = 0x4, offset = 0x4, fixed_abs, tag = 'smem constant byte address 0x4 - core index']
  #allocation1 [shape = 'u32[144,128]{1,0:T(1,128)}', space=vmem, size = 0x12000, scoped, tag = 'internal scratch']
  %s0 = inlined_call_operand.vmem [shape: f32[16,4], index: 0, kind: input, shape index: {}]
  %s1 = inlined_call_operand.vmem [shape: f32[2,4,128], index: 1, kind: input, shape index: {}]
  %s2 = inlined_call_operand.hbm [shape: f32[2,16,128], index: 2, kind: output, shape index: {}]
  %s3 = sld [smem:[#allocation0]]
  $region41: #{tpu_custom_call.1} parent=0
    _
  %s5 = ssub.s32 1, %s3
  %s6 = scalar_select 0, %s5, %s3
  $region1: #{tpu_custom_call.1} parent=0
    #allocation2 [shape = 'u8[16384]{0}', space=vmem, size = 0x4000, scoped, tag = 'output window, operand 0']
    #allocation3 [shape = 's32[2]{0}', space=sflag, size = 0x8, scoped, tag = 'scoped memory for tpu_custom_call.1']
    %7 = vsyncpa [#allocation3], 0
    %s8 = scalar_lea.sflag [#allocation3], 1
    %9 = vsyncpa %s8, 0
    loop: start=0, step=1, limit=4
    $region2: #{tpu_custom_call.1} parent=1 // loop_pre_header
      _
    $region3: #{tpu_custom_call.1} parent=1 // loop_header
      %s11 = sphi 0, %s15
      %p12 = scmp.ge.s32.totalorder %s11, 4
      %s19 = sphi 0, %s19
      %s21 = sphi 0, %s19
      %s22 = sphi 0, %s21
      %s36 = sphi 0, %s22
      %s42 = sphi 0, %s44
      %s45 = sphi 0, %s42
      %s46 = sphi 0, %s45
      %s62 = sphi 0, %s46
      %s68 = sphi 0, %s70
      %s71 = sphi 0, %s68
      %s72 = sphi 0, %s71
      %s88 = sphi 0, %s72
    $region4: #{tpu_custom_call.1} parent=1 // loop_header_branch
      %14 = sbr.rel (%p12) target = $region8
    $region5: #{tpu_custom_call.1} parent=1 // loop_body
      %s16 = ssub.s32 %s11, 1
      %s17 = ssub.s32 %s11, 2
      %s18 = sadd.s32 %s11, 1
      %s20 = sadd.s32 %s19, 1
      %p23 = scmp.eq.s32.totalorder %s11, 1
      %p24 = scmp.ne.s32.totalorder %s19, %s21
      %p25 = scmp.eq.s32.totalorder %s11, 0
      %p26 = por %p24, %p25
      %p27 = scmp.ne.s32.totalorder %s19, %s21
      %p28 = scmp.eq.s32.totalorder %s16, 1
      %p29 = por %p27, %p28
      %p30 = scmp.ne.s32.totalorder %s21, %s22
      %p31 = scmp.eq.s32.totalorder %s16, 0
      %p32 = por %p30, %p31
      %p33 = scmp.ne.s32.totalorder %s21, %s22
      %p34 = scmp.eq.s32.totalorder %s17, 1
      %p35 = por %p33, %p34
      %p37 = scmp.ne.s32.totalorder %s22, %s36
      %p38 = scmp.eq.s32.totalorder %s17, 0
      %p39 = por %p37, %p38
      %s40 = ssub.s32 %s11, %s18
      %p41 = scmp.eq.s32.totalorder %s40, 0
      %s43 = sadd.s32 %s42, 1
      %s44 = scalar_select %p41, %s42, %s43
      %p47 = pneg %p41
      %p48 = scmp.eq.s32.totalorder %s11, 1
      %p49 = por %p47, %p48
      %p50 = scmp.ne.s32.totalorder %s42, %s45
      %p51 = scmp.eq.s32.totalorder %s11, 0
      %p52 = por %p50, %p51
      %p53 = scmp.ne.s32.totalorder %s42, %s45
      %p54 = scmp.eq.s32.totalorder %s16, 1
      %p55 = por %p53, %p54
      %p56 = scmp.ne.s32.totalorder %s45, %s46
      %p57 = scmp.eq.s32.totalorder %s16, 0
      %p58 = por %p56, %p57
      %p59 = scmp.ne.s32.totalorder %s45, %s46
      %p60 = scmp.eq.s32.totalorder %s17, 1
      %p61 = por %p59, %p60
      %p63 = scmp.ne.s32.totalorder %s46, %s62
      %p64 = scmp.eq.s32.totalorder %s17, 0
      %p65 = por %p63, %p64
      %s66 = ssub.s32 %s11, %s18
      %p67 = scmp.eq.s32.totalorder %s66, 0
      %s69 = sadd.s32 %s68, 1
      %s70 = scalar_select %p67, %s68, %s69
      %p73 = pneg %p67
      %p74 = scmp.eq.s32.totalorder %s11, 1
      %p75 = por %p73, %p74
      %p76 = scmp.ne.s32.totalorder %s68, %s71
      %p77 = scmp.eq.s32.totalorder %s11, 0
      %p78 = por %p76, %p77
      %p79 = scmp.ne.s32.totalorder %s68, %s71
      %p80 = scmp.eq.s32.totalorder %s16, 1
      %p81 = por %p79, %p80
      %p82 = scmp.ne.s32.totalorder %s71, %s72
      %p83 = scmp.eq.s32.totalorder %s16, 0
      %p84 = por %p82, %p83
      %p85 = scmp.ne.s32.totalorder %s71, %s72
      %p86 = scmp.eq.s32.totalorder %s17, 1
      %p87 = por %p85, %p86
      %p89 = scmp.ne.s32.totalorder %s72, %s88
      %p90 = scmp.eq.s32.totalorder %s17, 0
      %p91 = por %p89, %p90
      %p92 = scmp.le.s32.totalorder 1, %s11
      %p93 = scmp.lt.s32.totalorder %s11, 3
      %p94 = pnand %p92, %p93
      %p95 = pneg %p94
      // Predicated region
      $region9: #{tpu_custom_call.1} parent=5 // pred_check
        _
      $region10: #{tpu_custom_call.1} parent=5 // pred_check_branch
        %97 = sbr.rel (%p94) target = $region12
      $region11: #{tpu_custom_call.1} parent=5 // pred_region
        %s98 = ssub.s32 %s11, 1
        // Predicated region
        $region13: #{tpu_custom_call.1} parent=11 // pred_check
          %p99 = pneg %p32
        $region14: #{tpu_custom_call.1} parent=11 // pred_check_branch
          %101 = sbr.rel (%p99) target = $region16
        $region15: #{tpu_custom_call.1} parent=11 // pred_region
          _
        $region16: #{tpu_custom_call.1} parent=11 // pred_fallthru
          _
      $region12: #{tpu_custom_call.1} parent=5 // pred_fallthru
        _
      %p102 = scmp.lt.s32.totalorder %s11, 2
      // Predicated region
      $region17: #{tpu_custom_call.1} parent=5 // pred_check
        %p103 = pneg %p102
      $region18: #{tpu_custom_call.1} parent=5 // pred_check_branch
        %105 = sbr.rel (%p103) target = $region20
      $region19: #{tpu_custom_call.1} parent=5 // pred_region
        // Predicated region
        $region21: #{tpu_custom_call.1} parent=19 // pred_check
          %p106 = pneg %p52
        $region22: #{tpu_custom_call.1} parent=19 // pred_check_branch
          %108 = sbr.rel (%p106) target = $region24
        $region23: #{tpu_custom_call.1} parent=19 // pred_region
          %p109 = scmp.lt.s32.totalorder %s11, 1
          %s110 = scalar_select %p109, %s11, 1
          %s111 = smul.addr %s110, 4
          %s112 = scalar_lea.vmem %s1, %s111
        $region24: #{tpu_custom_call.1} parent=19 // pred_fallthru
          _
      $region20: #{tpu_custom_call.1} parent=5 // pred_fallthru
        _
      %p113 = scmp.le.s32.totalorder 1, %s11
      %p114 = scmp.lt.s32.totalorder %s11, 3
      %p115 = pnand %p113, %p114
      %p116 = pneg %p115
      // Predicated region
      $region25: #{tpu_custom_call.1} parent=5 // pred_check
        _
      $region26: #{tpu_custom_call.1} parent=5 // pred_check_branch
        %118 = sbr.rel (%p115) target = $region28
      $region27: #{tpu_custom_call.1} parent=5 // pred_region
        %s119 = ssub.s32 %s11, 1
        %p120 = pneg %p32
        %p121 = pneg %p29
        %p122 = scmp.lt.s32.totalorder %s16, 1
        %s123 = scalar_select %p122, %s16, 1
        %s124 = smul.addr %s123, 4
        %s125 = scalar_lea.vmem %s1, %s124
        %p126 = pneg %p58
        %p127 = pneg %p55
        %p128 = pneg %p84
        %p129 = pneg %p81
        %s130 = sand.u32 %s71, 1
        %s131 = scalar_lea.sflag [#allocation3], %s130
        %s132 = sand.u32 %s71, 1
        %s133 = smul.addr %s132, 16
        %s134 = scalar_lea.vmem [#allocation2], %s133
        %p135 = scmp.lt.s32.totalorder %s16, 1
        %s136 = scalar_select %p135, %s16, 1
        %s137 = smul.addr %s136, 4
        %s138 = scalar_lea.vmem %s1, %s137
        %v139 = vld [vmem:[%s0] sm:$0xff]
        %v140 = vld [vmem:[%s0 + $0x8] sm:$0xff]
        %v141 = vld [vmem:[%s138] sm:$0xf]
        %vm142 = vcmask 31744
        %v144 = vsel %vm142, %v139, 0
        %v147 = vsel %vm142, %v140, 0
        %vm149 = vcmask 1043456
        %v151 = vsel %vm149, %v141, 0
        %153 = vmatprep.subr.mxu0 0.0
        %154 = vmatpush1.msra.mxu0 %v151
        %155 = vmatprep.subr.mxu0 0.0
        %156 = vmatpush1.msra.mxu0 0.0
        %157 = vmatprep.subr.mxu0 0.0
        %158 = vmatpush1.msra.mxu0 0.0
        %159 = vmatprep.subr.mxu0 0.0
        %160 = vmatpush1.msra.mxu0 0.0
        %161 = vmatprep.subr.mxu0 0.0
        %162 = vmatpush1.msra.mxu0 0.0
        %163 = vmatprep.subr.mxu0 0.0
        %164 = vmatpush1.msra.mxu0 0.0
        %165 = vmatprep.subr.mxu0 0.0
        %166 = vmatpush1.msra.mxu0 0.0
        %167 = vmatprep.subr.mxu0 0.0
        %168 = vmatpush1.msra.mxu0 0.0
        %169 = vmatprep.subr.mxu0 0.0
        %170 = vmatpush1.msra.mxu0 0.0
        %171 = vmatprep.subr.mxu0 0.0
        %172 = vmatpush1.msra.mxu0 0.0
        %173 = vmatprep.subr.mxu0 0.0
        %174 = vmatpush1.msra.mxu0 0.0
        %175 = vmatprep.subr.mxu0 0.0
        %176 = vmatpush1.msra.mxu0 0.0
        %177 = vmatprep.subr.mxu0 0.0
        %178 = vmatpush1.msra.mxu0 0.0
        %179 = vmatprep.subr.mxu0 0.0
        %180 = vmatpush1.msra.mxu0 0.0
        %181 = vmatprep.subr.mxu0 0.0
        %182 = vmatpush1.msra.mxu0 0.0
        %183 = vmatprep.subr.mxu0 0.0
        %184 = vmatpush1.msra.mxu0 0.0
        %185 = vmatprep.subr.mxu0 0.0
        %186 = vmatpush1.msra.mxu0 0.0
        %187 = vmatprep.subr.mxu0 0.0
        %188 = vmatpush1.msra.mxu0 0.0
        %189 = vmatprep.subr.mxu0 0.0
        %190 = vmatpush1.msra.mxu0 0.0
        %191 = vmatprep.subr.mxu0 0.0
        %192 = vmatpush1.msra.mxu0 0.0
        %193 = vmatprep.subr.mxu0 0.0
        %194 = vmatpush1.msra.mxu0 0.0
        %195 = vmatprep.subr.mxu0 0.0
        %196 = vmatpush1.msra.mxu0 0.0
        %197 = vmatprep.subr.mxu0 0.0
        %198 = vmatpush1.msra.mxu0 0.0
        %199 = vmatprep.subr.mxu0 0.0
        %200 = vmatpush1.msra.mxu0 0.0
        %201 = vmatprep.subr.mxu0 0.0
        %202 = vmatpush1.msra.mxu0 0.0
        %203 = vmatprep.subr.mxu0 0.0
        %204 = vmatpush1.msra.mxu0 0.0
        %205 = vmatprep.subr.mxu0 0.0
        %206 = vmatpush1.msra.mxu0 0.0
        %207 = vmatprep.subr.mxu0 0.0
        %208 = vmatpush1.msra.mxu0 0.0
        %209 = vmatprep.subr.mxu0 0.0
        %210 = vmatpush1.msra.mxu0 0.0
        %211 = vmatprep.subr.mxu0 0.0
        %212 = vmatpush1.msra.mxu0 0.0
        %213 = vmatprep.subr.mxu0 0.0
        %214 = vmatpush1.msra.mxu0 0.0
        %215 = vmatprep.subr.mxu0 0.0
        %216 = vmatpush1.msra.mxu0 0.0
        %217 = vmatprep.mubr.f32.mxu0 0.0
        %218 = vmatmul.mubr.f32.gmra.mrb[0].mxu0 %v144
        %v219 = vpop.f32.mrb[0].mxu0
        %v220 = vadd.f32 0.0, %v219
        %v221 = vpop.f32.mrb[0].mxu0
        %222 = vmatprep.mubr.f32.mxu0 0.0
        %223 = vmatmul.mubr.f32.gmra.mrb[0].mxu0 %v147
        %v224 = vpop.f32.mrb[0].mxu0
        %v225 = vadd.f32 0.0, %v224
        %v226 = vpop.f32.mrb[0].mxu0
        %227 = vdwg.mxu0
        %228 = vst [vmem:[%s134] sm:$0xff] %v220
        %229 = vst [vmem:[%s134 + $0x8] sm:$0xff] %v225
        %s230 = sand.u32 %s71, 1
        %s231 = scalar_lea.sflag [#allocation3], %s230
        %s232 = sand.u32 %s71, 1
        %s233 = smul.addr %s232, 16
        %s234 = scalar_lea.vmem [#allocation2], %s233
        // Predicated region
        $region29: #{tpu_custom_call.1} parent=27 // pred_check
          %p235 = pneg %p81
        $region30: #{tpu_custom_call.1} parent=27 // pred_check_branch
          %237 = sbr.rel (%p235) target = $region32
        $region31: #{tpu_custom_call.1} parent=27 // pred_region
          %s239 = ssub.s32 256, 256
          %240 = vsyncadd %s231, %s239
          %s241 = smul.addr %s16, 2
          %s242 = smul.addr %s241, 128
          %s243 = scalar_lea.hbm %s2, %s242
          %s244 = sshll.u32 %s234, 4
          %s245 = int_to_ptr.vmem [resolvable:$true] %s244
          %250 = dma.vmem_to_hbm [thread:$0]  %s245, 256, %s243, %s231, 128, 128, 8
        $region32: #{tpu_custom_call.1} parent=27 // pred_fallthru
          _
      $region28: #{tpu_custom_call.1} parent=5 // pred_fallthru
        _
      %p251 = scmp.le.s32.totalorder 2, %s11
      // Predicated region
      $region33: #{tpu_custom_call.1} parent=5 // pred_check
        %p252 = pneg %p251
      $region34: #{tpu_custom_call.1} parent=5 // pred_check_branch
        %254 = sbr.rel (%p252) target = $region36
      $region35: #{tpu_custom_call.1} parent=5 // pred_region
        %s255 = ssub.s32 %s11, 2
        // Predicated region
        $region37: #{tpu_custom_call.1} parent=35 // pred_check
          %p256 = pneg %p87
        $region38: #{tpu_custom_call.1} parent=35 // pred_check_branch
          %258 = sbr.rel (%p256) target = $region40
        $region39: #{tpu_custom_call.1} parent=35 // pred_region
          %s259 = sand.u32 %s72, 1
          %s260 = scalar_lea.sflag [#allocation3], %s259
          %s261 = sand.u32 %s72, 1
          %s262 = smul.addr %s261, 16
          %s263 = scalar_lea.vmem [#allocation2], %s262
          %264 = dma.done %s260, 256
        $region40: #{tpu_custom_call.1} parent=35 // pred_fallthru
          _
      $region36: #{tpu_custom_call.1} parent=5 // pred_fallthru
        _
    $region6: #{tpu_custom_call.1} parent=1 // loop_footer
      %s15 = sadd.s32 1, %s11
    $region7: #{tpu_custom_call.1} parent=1 // loop_footer_branch
      %10 = sbr.rel target = $region3
    $region8: #{tpu_custom_call.1} parent=1 // loop_exit
      _
    %265 = vsyncpa [#allocation3], 1
    %s266 = scalar_lea.sflag [#allocation3], 1
    %267 = vsyncpa %s266, 1

</llo_original>
